<compile_context>
chip_gen: v7x
topology: tpu7x:2x2x1
jax: 0.10.0
libtpu: 0.0.40
codegen_flags: <defaults>
</compile_context>

<pallas_src>
import functools

import jax
import jax.numpy as jnp
from jax import lax
from jax.experimental import pallas as pl
from jax.experimental.pallas import tpu as pltpu


_ROW_MULT = 0x27D4EB2D
_COL_MULT = 0x165667B1
_VMEM_BUDGET = 24 * 1024 * 1024   # conservative: fits v7x (64 MiB physical)


def _round_up(a, m):
    return ((a + m - 1) // m) * m


def _pick_tile(dim, max_tile, granule):
    """Largest multiple of `granule` that divides `dim` and is <= max_tile."""
    t = max(granule, min(max_tile, dim))
    t -= t % granule
    while dim % t:
        t -= granule
    return t


def _mix32(h):
    """xorshift-multiply mixer (murmur-style finalizer); int32 wrap-around."""
    h = h ^ lax.shift_right_logical(h, jnp.int32(16))
    h = h * jnp.int32(0x7FEB352D)
    h = h ^ lax.shift_right_logical(h, jnp.int32(15))
    h = h * jnp.int32(0x3243F6A9)
    h = h ^ lax.shift_right_logical(h, jnp.int32(16))
    return h


def _epilogue(acc, bias, row0, col0, seed, *, activation, dropout_p, training,
              out_dtype):
    """bias + activation + inverted dropout on one f32 output tile."""
    y = acc + bias                                     # (tm, tn) + (1, tn)
    if activation == "relu":
        y = jnp.maximum(y, 0.0)
    elif activation == "tanh":
        y = jnp.tanh(y)                                # EUP slot, ~free vs MXU
    elif activation is not None:
        # TODO(synk): only None/relu/tanh activations are fused here.
        raise ValueError(f"unsupported activation: {activation!r}")

    if dropout_p is not None and training and dropout_p > 0.0:
        tm, tn = y.shape
        rows = lax.broadcasted_iota(jnp.int32, (tm, tn), 0)
        cols = lax.broadcasted_iota(jnp.int32, (tm, tn), 1)
        # Per-tile scalar part hoisted out of the per-element chain; the hash
        # of the GLOBAL (row, col) + seed is tiling-invariant.
        base = (row0 * jnp.int32(_ROW_MULT) + col0 * jnp.int32(_COL_MULT)
                + seed)
        h = _mix32(rows * jnp.int32(_ROW_MULT) + cols * jnp.int32(_COL_MULT)
                   + base)
        h24 = lax.shift_right_logical(h, jnp.int32(8))   # uniform in [0, 2^24)
        thresh = jnp.int32(int(round(dropout_p * float(1 << 24))))
        keep = h24 >= thresh
        y = jnp.where(keep, y * (1.0 / (1.0 - dropout_p)), 0.0)
    return y.astype(out_dtype)


def _kernel_resident_k(seed_ref, x_ref, w_ref, b_ref, o_ref, *,
                       activation, dropout_p, training, tm, tn):
    """2-D grid (j outer, i inner); full K resident; W panel reused across i."""
    # All program_id reads at top level (interpret-mode safe).
    j = pl.program_id(0)           # output-column block (outer)
    i = pl.program_id(1)           # output-row block (inner)
    seed = seed_ref[0]
    acc = jnp.dot(x_ref[...], w_ref[...], preferred_element_type=jnp.float32)
    o_ref[...] = _epilogue(acc, b_ref[...].astype(jnp.float32),
                           i * tm, j * tn, seed,
                           activation=activation, dropout_p=dropout_p,
                           training=training, out_dtype=o_ref.dtype)


def _kernel_k_loop(seed_ref, x_ref, w_ref, b_ref, o_ref, *scratch,
                   activation, dropout_p, training, tm, tn):
    """3-D grid (i, j, k) with reduction axis last (fallback for huge K)."""
    # All program_id / num_programs reads at top level (interpret-mode safe);
    # the pl.when bodies only close over the already-computed scalars.
    i = pl.program_id(0)
    j = pl.program_id(1)
    k = pl.program_id(2)
    nk = pl.num_programs(2)
    seed = seed_ref[0]
    # Accumulate directly into the resident output block when it is f32,
    # otherwise into the f32 VMEM scratch.
    acc_ref = scratch[0] if scratch else o_ref

    partial = jnp.dot(x_ref[...], w_ref[...],
                      preferred_element_type=jnp.float32)

    @pl.when(k == 0)
    def _init():
        acc_ref[...] = partial.astype(acc_ref.dtype)

    @pl.when(k > 0)
    def _accumulate():
        acc_ref[...] += partial.astype(acc_ref.dtype)

    @pl.when(k == nk - 1)
    def _finalize():
        o_ref[...] = _epilogue(acc_ref[...].astype(jnp.float32),
                               b_ref[...].astype(jnp.float32),
                               i * tm, j * tn, seed,
                               activation=activation, dropout_p=dropout_p,
                               training=training, out_dtype=o_ref.dtype)


def enhanced_linear(x, w_t, b, *, activation="relu", dropout_p=None,
                    training=False, seed=0, mxu_dtype=jnp.bfloat16,
                    tm_max=512, tn_max=512, tk_max=1024, force_k_loop=False):
    """Fused EnhancedLinear forward: dropout(activation(x @ w_t + b)).

    x:   [N, in_features]
    w_t: [in_features, out_features]   (transposed torch.nn.Linear weight)
    b:   [out_features]
    """
    n, d_in = x.shape
    k_dim, d_out = w_t.shape
    assert k_dim == d_in and b.shape == (d_out,)

    out_dtype = x.dtype
    mxu_dtype = jnp.dtype(mxu_dtype)
    mxu_bytes = mxu_dtype.itemsize
    out_bytes = jnp.dtype(out_dtype).itemsize

    # Pad only to the (8, 128) hardware granule, not to a full tile.
    n_pad = _round_up(n, 8)
    k_pad = _round_up(d_in, 128)
    m_pad = _round_up(d_out, 128)

    tm = _pick_tile(n_pad, tm_max, 8)
    tn = _pick_tile(m_pad, tn_max, 128)

    # v7x megacore: best-effort split so both TensorCores get a parallel block
    # (never shrink tn below 128 -> keeps lane-dense, unmasked stores on v5e).
    if (n_pad // tm) * (m_pad // tn) < 2:
        if tn > 128:
            tn = _pick_tile(m_pad, max(128, tn // 2), 128)
        elif tm > 8:
            tm = _pick_tile(n_pad, max(8, tm // 2), 8)

    acc_in_out = jnp.dtype(out_dtype) == jnp.dtype(jnp.float32)

    # Prefer keeping the full K dimension resident in VMEM: drops the K grid
    # axis, removes accumulator bookkeeping, and (with j as the OUTER grid
    # axis) fetches each W^T column panel from HBM exactly once.
    resident_need = (2 * (tm * k_pad + k_pad * tn) * mxu_bytes
                     + 2 * tm * tn * out_bytes + 2 * tn * 4)
    use_resident_k = (not force_k_loop) and resident_need <= _VMEM_BUDGET

    # Pad (only when needed) and cast the MXU operands.
    x_p = x if (n_pad == n and k_pad == d_in) else jnp.pad(
        x, ((0, n_pad - n), (0, k_pad - d_in)))
    w_p = w_t if (k_pad == d_in and m_pad == d_out) else jnp.pad(
        w_t, ((0, k_pad - d_in), (0, m_pad - d_out)))
    b2 = b.reshape(1, d_out).astype(jnp.float32)
    b_p = b2 if m_pad == d_out else jnp.pad(b2, ((0, 0), (0, m_pad - d_out)))
    if x_p.dtype != mxu_dtype:
        x_p = x_p.astype(mxu_dtype)
    if w_p.dtype != mxu_dtype:
        w_p = w_p.astype(mxu_dtype)
    seed_arr = jnp.asarray([seed], dtype=jnp.int32)

    grid_i = n_pad // tm
    grid_j = m_pad // tn

    if use_resident_k:
        kernel = functools.partial(
            _kernel_resident_k, activation=activation, dropout_p=dropout_p,
            training=training, tm=tm, tn=tn)
        grid = (grid_j, grid_i)                       # j outer, i inner
        in_specs = [
            pl.BlockSpec((tm, k_pad), lambda j, i, s: (i, 0)),   # x row panel
            pl.BlockSpec((k_pad, tn), lambda j, i, s: (0, j)),   # W^T panel
            pl.BlockSpec((1, tn),     lambda j, i, s: (0, j)),   # bias
        ]
        out_specs = pl.BlockSpec((tm, tn), lambda j, i, s: (i, j))
        scratch_shapes = []
        dim_sem = ("parallel", "parallel")
        vmem_need = resident_need
        bytes_accessed = (mxu_bytes * (n_pad * k_pad * grid_j + k_pad * m_pad)
                          + 4 * m_pad + out_bytes * n_pad * m_pad)
    else:
        tk = _pick_tile(k_pad, tk_max, 128)

        def _need3(tk_):
            return (2 * (tm * tk_ + tk_ * tn) * mxu_bytes
                    + 2 * tm * tn * out_bytes
                    + (0 if acc_in_out else tm * tn * 4) + 2 * tn * 4)

        while _need3(tk) > _VMEM_BUDGET and tk > 128:
            tk = _pick_tile(k_pad, max(128, tk // 2), 128)

        kernel = functools.partial(
            _kernel_k_loop, activation=activation, dropout_p=dropout_p,
            training=training, tm=tm, tn=tn)
        grid = (grid_i, grid_j, k_pad // tk)
        in_specs = [
            pl.BlockSpec((tm, tk), lambda i, j, k, s: (i, k)),   # x
            pl.BlockSpec((tk, tn), lambda i, j, k, s: (k, j)),   # W^T
            pl.BlockSpec((1, tn),  lambda i, j, k, s: (0, j)),   # bias
        ]
        out_specs = pl.BlockSpec((tm, tn), lambda i, j, k, s: (i, j))
        scratch_shapes = ([] if acc_in_out
                          else [pltpu.VMEM((tm, tn), jnp.float32)])
        dim_sem = ("parallel", "parallel", "arbitrary")
        vmem_need = _need3(tk)
        bytes_accessed = (mxu_bytes * (n_pad * k_pad * grid_j
                                       + k_pad * m_pad * grid_i)
                          + 4 * m_pad + out_bytes * n_pad * m_pad)

    vmem_limit = int(min(64 * 1024 * 1024,
                         max(vmem_need + (2 << 20), 32 * 1024 * 1024)))

    out = pl.pallas_call(
        kernel,
        out_shape=jax.ShapeDtypeStruct((n_pad, m_pad), out_dtype),
        grid_spec=pltpu.PrefetchScalarGridSpec(
            num_scalar_prefetch=1,
            grid=grid,
            in_specs=in_specs,
            out_specs=out_specs,
            scratch_shapes=scratch_shapes,
        ),
        compiler_params=pltpu.CompilerParams(
            dimension_semantics=dim_sem,
            vmem_limit_bytes=vmem_limit),
        cost_estimate=pl.CostEstimate(
            flops=2 * n_pad * k_pad * m_pad,
            transcendentals=(n_pad * m_pad if activation == "tanh" else 0),
            bytes_accessed=int(bytes_accessed)),
    )(seed_arr, x_p, w_p, b_p)

    if n_pad != n or m_pad != d_out:
        out = out[:n, :d_out]
    return out


if __name__ == "__main__":
    batch, d_in, d_out = 8, 256, 128
    p_drop = 0.5

    key = jax.random.PRNGKey(0)
    kx, kw, kb = jax.random.split(key, 3)
    x = jax.random.normal(kx, (batch, d_in), dtype=jnp.float32)
    # torch.nn.Linear weight is [out, in]; the kernel takes the transpose.
    w = jax.random.normal(kw, (d_out, d_in), dtype=jnp.float32) * 0.05
    b = jax.random.normal(kb, (d_out,), dtype=jnp.float32) * 0.1
    w_t = w.T

    ref_lin = jnp.dot(x, w_t, precision=lax.Precision.HIGHEST) + b[None, :]
    ref_relu = jnp.maximum(ref_lin, 0.0)

    # 1) Plain Linear (no activation/dropout), f32 MXU path, resident-K grid.
    y1 = jax.block_until_ready(
        enhanced_linear(x, w_t, b, activation=None, dropout_p=None,
                        mxu_dtype=jnp.float32))
    assert y1.shape == (batch, d_out)
    assert jnp.allclose(y1, ref_lin, atol=3e-2, rtol=3e-2), "linear mismatch"

    # 2) Linear + ReLU, dropout in eval mode (identity), f32 path.
    y2 = jax.block_until_ready(
        enhanced_linear(x, w_t, b, activation="relu",
                        dropout_p=p_drop, training=False,
                        mxu_dtype=jnp.float32))
    assert jnp.allclose(y2, ref_relu, atol=3e-2, rtol=3e-2), "eval mismatch"

    # 3) Same, forcing the 3-D K-loop fallback (2 reduction steps).
    y3 = jax.block_until_ready(
        enhanced_linear(x, w_t, b, activation="relu",
                        dropout_p=p_drop, training=False,
                        mxu_dtype=jnp.float32, force_k_loop=True, tk_max=128))
    assert jnp.allclose(y3, ref_relu, atol=3e-2, rtol=3e-2), "k-loop mismatch"

    # 4) Training-mode dropout: every element is either 0 or scaled by 1/(1-p).
    y4 = jax.block_until_ready(
        enhanced_linear(x, w_t, b, activation="relu",
                        dropout_p=p_drop, training=True, seed=123,
                        mxu_dtype=jnp.float32))
    scaled = ref_relu / (1.0 - p_drop)
    ok4 = (jnp.isclose(y4, 0.0, atol=1e-6)
           | jnp.isclose(y4, scaled, atol=3e-2, rtol=3e-2))
    assert bool(jnp.all(ok4)), "training-mode dropout values out of range"

    # 5) Same seed through the forced K-loop path: the dropout mask must be
    #    identical (hash depends only on the global element index + seed).
    y5 = jax.block_until_ready(
        enhanced_linear(x, w_t, b, activation="relu",
                        dropout_p=p_drop, training=True, seed=123,
                        mxu_dtype=jnp.float32, force_k_loop=True, tk_max=128))
    assert jnp.allclose(y4, y5, atol=1e-2, rtol=1e-2), "dropout not tile-invariant"

    # 6) Default bf16-MXU-operand path (f32 accumulation), looser tolerance.
    y6 = jax.block_until_ready(
        enhanced_linear(x, w_t, b, activation="relu",
                        dropout_p=p_drop, training=False))
    assert jnp.allclose(y6, ref_relu, atol=6e-2, rtol=6e-2), "bf16 mismatch"

    # 7) Unaligned shapes exercise the pad/slice path.
    x_u = jax.random.normal(jax.random.PRNGKey(1), (5, 33), dtype=jnp.float32)
    w_u = jax.random.normal(jax.random.PRNGKey(2), (65, 33),
                            dtype=jnp.float32) * 0.1
    b_u = jax.random.normal(jax.random.PRNGKey(3), (65,),
                            dtype=jnp.float32) * 0.1
    ref_u = jnp.maximum(
        jnp.dot(x_u, w_u.T, precision=lax.Precision.HIGHEST) + b_u[None, :],
        0.0)
    y7 = jax.block_until_ready(
        enhanced_linear(x_u, w_u.T, b_u, activation="relu", dropout_p=None,
                        mxu_dtype=jnp.float32))
    assert y7.shape == (5, 65)
    assert jnp.allclose(y7, ref_u, atol=3e-2, rtol=3e-2), "padded-shape mismatch"

    # 8) bf16 inputs + forced K loop exercise the non-f32-output scratch
    #    accumulator path.
    y8 = jax.block_until_ready(
        enhanced_linear(x.astype(jnp.bfloat16), w_t.astype(jnp.bfloat16), b,
                        activation="relu", dropout_p=None,
                        force_k_loop=True, tk_max=128))
    assert y8.dtype == jnp.bfloat16
    assert jnp.allclose(y8.astype(jnp.float32), ref_relu,
                        atol=8e-2, rtol=8e-2), "bf16-output k-loop mismatch"

    print("KERNEL_OK")
</pallas_src>

<mosaic_0001>
module attributes {stable_mosaic.version = 11 : i64} {
  func.func @_kernel_resident_k(%arg0: i32, %arg1: i32, %arg2: memref<1xi32, #tpu.memory_space<smem>>, %arg3: memref<8x256xf32, #tpu.memory_space<vmem>>, %arg4: memref<256x128xf32, #tpu.memory_space<vmem>>, %arg5: memref<1x128xf32, #tpu.memory_space<vmem>>, %arg6: memref<8x128xf32, #tpu.memory_space<vmem>>) attributes {dimension_semantics = [#tpu.dimension_semantics<parallel>, #tpu.dimension_semantics<parallel>], iteration_bounds = array<i64: 1, 1>, scalar_prefetch = 1 : i64, scratch_operands = 0 : i64, tpu.core_type = #tpu.core_type<tc>, window_params = [{transform_indices = @transform_0, window_bounds = array<i64: 8, 256>}, {transform_indices = @transform_1, window_bounds = array<i64: 256, 128>}, {transform_indices = @transform_2, window_bounds = array<i64: 1, 128>}, {transform_indices = @transform_3, window_bounds = array<i64: 8, 128>}]} {
    %c0 = arith.constant 0 : index
    %c0_0 = arith.constant 0 : index
    %0 = vector.load %arg3[%c0, %c0_0] : memref<8x256xf32, #tpu.memory_space<vmem>>, vector<8x256xf32>
    %c0_1 = arith.constant 0 : index
    %c0_2 = arith.constant 0 : index
    %1 = vector.load %arg4[%c0_1, %c0_2] : memref<256x128xf32, #tpu.memory_space<vmem>>, vector<256x128xf32>
    %cst = arith.constant dense<0.000000e+00> : vector<8x128xf32>
    %2 = tpu.matmul %0, %1, %cst {dimension_numbers = #tpu.dot_dimension_numbers<[1], [0], [0], [1], [0, 0, 1, 1], [], []>} : vector<8x256xf32>, vector<256x128xf32>, vector<8x128xf32> -> vector<8x128xf32>
    %c0_3 = arith.constant 0 : index
    %c0_4 = arith.constant 0 : index
    %3 = vector.load %arg5[%c0_3, %c0_4] : memref<1x128xf32, #tpu.memory_space<vmem>>, vector<1x128xf32>
    %4 = vector.broadcast %3 : vector<1x128xf32> to vector<8x128xf32>
    %5 = arith.addf %2, %4 : vector<8x128xf32>
    %c0_5 = arith.constant 0 : index
    %c0_6 = arith.constant 0 : index
    %6 = vector.load %arg6[%c0_5, %c0_6] : memref<8x128xf32, #tpu.memory_space<vmem>>, vector<8x128xf32>
    tpu.vector_store %arg6[%c0_5, %c0_6], %5 {strides = array<i32>} : memref<8x128xf32, #tpu.memory_space<vmem>>, vector<8x128xf32>,
    return
  }
  func.func @transform_0(%arg0: i32, %arg1: i32, %arg2: memref<1xi32, #tpu.memory_space<smem>>) -> (i32, i32) {
    %c0_i32 = arith.constant 0 : i32
    %c0_i32_0 = arith.constant 0 : i32
    return %arg1, %c0_i32 : i32, i32
  }
  func.func @transform_1(%arg0: i32, %arg1: i32, %arg2: memref<1xi32, #tpu.memory_space<smem>>) -> (i32, i32) {
    %c0_i32 = arith.constant 0 : i32
    %c0_i32_0 = arith.constant 0 : i32
    return %c0_i32, %arg0 : i32, i32
  }
  func.func @transform_2(%arg0: i32, %arg1: i32, %arg2: memref<1xi32, #tpu.memory_space<smem>>) -> (i32, i32) {
    %c0_i32 = arith.constant 0 : i32
    %c0_i32_0 = arith.constant 0 : i32
    return %c0_i32, %arg0 : i32, i32
  }
  func.func @transform_3(%arg0: i32, %arg1: i32, %arg2: memref<1xi32, #tpu.memory_space<smem>>) -> (i32, i32) {
    %c0_i32 = arith.constant 0 : i32
    return %arg1, %arg0 : i32, i32
  }
}

</mosaic_0001>

<llo_original>
// kernel: tpu_custom_call.1
$region0: #{tpu_custom_call.1}
  #allocation0 [shape = 'u32[]', space=smem, size = 0x4, offset = 0x4, fixed_abs, tag = 'smem constant byte address 0x4 - core index']
  #allocation1 [shape = 'u32[144,128]{1,0:T(1,128)}', space=vmem, size = 0x12000, scoped, tag = 'internal scratch']
  #allocation2 [shape = 's32[1]{0}', space=sflag, size = 0x4, scoped, tag = 'scoped memory for tpu_custom_call.1']
  #allocation3 [shape = 's32[1]{0:T(128)S(6)}', space=smem, size = 0x200, scoped, tag = 'prefetched SMEM operand 0']
  %s0 = inlined_call_operand.<no memory space> [shape: s32[1], index: 0, kind: input, shape index: {}]
  %s1 = inlined_call_operand.hbm [shape: f32[8,256], index: 1, kind: input, shape index: {}]
  %s2 = inlined_call_operand.hbm [shape: f32[256,128], index: 2, kind: input, shape index: {}]
  %s3 = inlined_call_operand.vmem [shape: f32[1,128], index: 3, kind: input, shape index: {}]
  %s4 = inlined_call_operand.hbm [shape: f32[8,128], index: 4, kind: output, shape index: {}]
  %s5 = sld [smem:[#allocation0]]
  $region30: #{tpu_custom_call.1} parent=0
    _
  %s7 = ssub.s32 1, %s5
  %s8 = scalar_select 0, %s7, %s5
  %9 = sst [smem:[#allocation3]] %s0
  $region1: #{tpu_custom_call.1} parent=0
    #allocation4 [shape = 'u8[8192]{0}', space=vmem, size = 0x2000, scoped, tag = 'input window, operand 1, single buffered']
    #allocation5 [shape = 's32[1]{0}', space=sflag, size = 0x4, scoped, tag = 'scoped memory for tpu_custom_call.1']
    #allocation6 [shape = 's32[1]{0}', space=sflag, size = 0x4, scoped, tag = 'scoped memory for tpu_custom_call.1']
    #allocation7 [shape = 'u8[131072]{0}', space=vmem, size = 0x20000, scoped, tag = 'input window, operand 2, single buffered']
    #allocation8 [shape = 's32[1]{0}', space=sflag, size = 0x4, scoped, tag = 'scoped memory for tpu_custom_call.1']
    #allocation9 [shape = 'u8[4096]{0}', space=vmem, size = 0x1000, scoped, tag = 'output window, operand 0, single buffered']
    %10 = vsyncpa [#allocation5], 0
    %11 = vsyncpa [#allocation8], 0
    %12 = vsyncpa [#allocation6], 0
    // Predicated region
    $region2: #{tpu_custom_call.1} parent=1 // pred_check
      _
    $region3: #{tpu_custom_call.1} parent=1 // pred_check_branch
      %14 = sbr.rel (0) target = $region5
    $region4: #{tpu_custom_call.1} parent=1 // pred_region
      %s16 = ssub.s32 256, 256
      %17 = vsyncadd [#allocation5], %s16
      %s19 = sshll.u32 [#allocation4], 4
      %s20 = int_to_ptr.vmem [resolvable:$true] %s19
      %22 = dma.hbm_to_vmem [thread:$0]  %s1, 256, %s20, [#allocation5]
    $region5: #{tpu_custom_call.1} parent=1 // pred_fallthru
      _
    // Predicated region
    $region6: #{tpu_custom_call.1} parent=1 // pred_check
      _
    $region7: #{tpu_custom_call.1} parent=1 // pred_check_branch
      %24 = sbr.rel (0) target = $region9
    $region8: #{tpu_custom_call.1} parent=1 // pred_region
      %s26 = ssub.s32 4096, 4096
      %27 = vsyncadd [#allocation8], %s26
      %s28 = sshll.u32 [#allocation7], 4
      %s29 = int_to_ptr.vmem [resolvable:$true] %s28
      %34 = dma.hbm_to_vmem [thread:$0]  %s2, 4096, %s29, [#allocation8], 128, 128, 8
    $region9: #{tpu_custom_call.1} parent=1 // pred_fallthru
      _
    // Predicated region
    $region10: #{tpu_custom_call.1} parent=1 // pred_check
      _
    $region11: #{tpu_custom_call.1} parent=1 // pred_check_branch
      %36 = sbr.rel (0) target = $region13
    $region12: #{tpu_custom_call.1} parent=1 // pred_region
      _
    $region13: #{tpu_custom_call.1} parent=1 // pred_fallthru
      _
    // Predicated region
    $region14: #{tpu_custom_call.1} parent=1 // pred_check
      _
    $region15: #{tpu_custom_call.1} parent=1 // pred_check_branch
      %38 = sbr.rel (0) target = $region17
    $region16: #{tpu_custom_call.1} parent=1 // pred_region
      %39 = dma.done [#allocation5], 256
    $region17: #{tpu_custom_call.1} parent=1 // pred_fallthru
      _
    // Predicated region
    $region18: #{tpu_custom_call.1} parent=1 // pred_check
      _
    $region19: #{tpu_custom_call.1} parent=1 // pred_check_branch
      %41 = sbr.rel (0) target = $region21
    $region20: #{tpu_custom_call.1} parent=1 // pred_region
      %42 = dma.done [#allocation8], 4096
    $region21: #{tpu_custom_call.1} parent=1 // pred_fallthru
      _
    %v43 = vld [vmem:[#allocation4] sm:$0xff]
    %v44 = vld [vmem:[#allocation4 + $0x8] sm:$0xff]
    %v45 = vld [vmem:[#allocation7] sm:$0xff]
    %v46 = vld [vmem:[#allocation7 + $0x8] sm:$0xff]
    %v47 = vld [vmem:[#allocation7 + $0x10] sm:$0xff]
    %v48 = vld [vmem:[#allocation7 + $0x18] sm:$0xff]
    %v49 = vld [vmem:[#allocation7 + $0x20] sm:$0xff]
    %v50 = vld [vmem:[#allocation7 + $0x28] sm:$0xff]
    %v51 = vld [vmem:[#allocation7 + $0x30] sm:$0xff]
    %v52 = vld [vmem:[#allocation7 + $0x38] sm:$0xff]
    %v53 = vld [vmem:[#allocation7 + $0x40] sm:$0xff]
    %v54 = vld [vmem:[#allocation7 + $0x48] sm:$0xff]
    %v55 = vld [vmem:[#allocation7 + $0x50] sm:$0xff]
    %v56 = vld [vmem:[#allocation7 + $0x58] sm:$0xff]
    %v57 = vld [vmem:[#allocation7 + $0x60] sm:$0xff]
    %v58 = vld [vmem:[#allocation7 + $0x68] sm:$0xff]
    %v59 = vld [vmem:[#allocation7 + $0x70] sm:$0xff]
    %v60 = vld [vmem:[#allocation7 + $0x78] sm:$0xff]
    %v61 = vld [vmem:[#allocation7 + $0x80] sm:$0xff]
    %v62 = vld [vmem:[#allocation7 + $0x88] sm:$0xff]
    %v63 = vld [vmem:[#allocation7 + $0x90] sm:$0xff]
    %v64 = vld [vmem:[#allocation7 + $0x98] sm:$0xff]
    %v65 = vld [vmem:[#allocation7 + $0xa0] sm:$0xff]
    %v66 = vld [vmem:[#allocation7 + $0xa8] sm:$0xff]
    %v67 = vld [vmem:[#allocation7 + $0xb0] sm:$0xff]
    %v68 = vld [vmem:[#allocation7 + $0xb8] sm:$0xff]
    %v69 = vld [vmem:[#allocation7 + $0xc0] sm:$0xff]
    %v70 = vld [vmem:[#allocation7 + $0xc8] sm:$0xff]
    %v71 = vld [vmem:[#allocation7 + $0xd0] sm:$0xff]
    %v72 = vld [vmem:[#allocation7 + $0xd8] sm:$0xff]
    %v73 = vld [vmem:[#allocation7 + $0xe0] sm:$0xff]
    %v74 = vld [vmem:[#allocation7 + $0xe8] sm:$0xff]
    %v75 = vld [vmem:[#allocation7 + $0xf0] sm:$0xff]
    %v76 = vld [vmem:[#allocation7 + $0xf8] sm:$0xff]
    %v77 = vld [vmem:[%s3] sm:$0x1]
    %v79 = vlaneseq
    %v80 = vshrl.u32 %v79, 7
    %v81 = vsub.s32 0, %v80
    %v82 = vrot.slane %v77, %v81
    %84 = vmatprep.subr.mxu0 0.0
    %85 = vmatpush1.msra.mxu0 %v45
    %86 = vmatprep.subr.mxu0 0.0
    %87 = vmatpush1.msra.mxu0 %v46
    %88 = vmatprep.subr.mxu0 0.0
    %89 = vmatpush1.msra.mxu0 %v47
    %90 = vmatprep.subr.mxu0 0.0
    %91 = vmatpush1.msra.mxu0 %v48
    %92 = vmatprep.subr.mxu0 0.0
    %93 = vmatpush1.msra.mxu0 %v49
    %94 = vmatprep.subr.mxu0 0.0
    %95 = vmatpush1.msra.mxu0 %v50
    %96 = vmatprep.subr.mxu0 0.0
    %97 = vmatpush1.msra.mxu0 %v51
    %98 = vmatprep.subr.mxu0 0.0
    %99 = vmatpush1.msra.mxu0 %v52
    %100 = vmatprep.subr.mxu0 0.0
    %101 = vmatpush1.msra.mxu0 %v53
    %102 = vmatprep.subr.mxu0 0.0
    %103 = vmatpush1.msra.mxu0 %v54
    %104 = vmatprep.subr.mxu0 0.0
    %105 = vmatpush1.msra.mxu0 %v55
    %106 = vmatprep.subr.mxu0 0.0
    %107 = vmatpush1.msra.mxu0 %v56
    %108 = vmatprep.subr.mxu0 0.0
    %109 = vmatpush1.msra.mxu0 %v57
    %110 = vmatprep.subr.mxu0 0.0
    %111 = vmatpush1.msra.mxu0 %v58
    %112 = vmatprep.subr.mxu0 0.0
    %113 = vmatpush1.msra.mxu0 %v59
    %114 = vmatprep.subr.mxu0 0.0
    %115 = vmatpush1.msra.mxu0 %v60
    %116 = vmatprep.subr.mxu0 0.0
    %117 = vmatpush1.msra.mxu0 %v61
    %118 = vmatprep.subr.mxu0 0.0
    %119 = vmatpush1.msra.mxu0 %v62
    %120 = vmatprep.subr.mxu0 0.0
    %121 = vmatpush1.msra.mxu0 %v63
    %122 = vmatprep.subr.mxu0 0.0
    %123 = vmatpush1.msra.mxu0 %v64
    %124 = vmatprep.subr.mxu0 0.0
    %125 = vmatpush1.msra.mxu0 %v65
    %126 = vmatprep.subr.mxu0 0.0
    %127 = vmatpush1.msra.mxu0 %v66
    %128 = vmatprep.subr.mxu0 0.0
    %129 = vmatpush1.msra.mxu0 %v67
    %130 = vmatprep.subr.mxu0 0.0
    %131 = vmatpush1.msra.mxu0 %v68
    %132 = vmatprep.subr.mxu0 0.0
    %133 = vmatpush1.msra.mxu0 %v69
    %134 = vmatprep.subr.mxu0 0.0
    %135 = vmatpush1.msra.mxu0 %v70
    %136 = vmatprep.subr.mxu0 0.0
    %137 = vmatpush1.msra.mxu0 %v71
    %138 = vmatprep.subr.mxu0 0.0
    %139 = vmatpush1.msra.mxu0 %v72
    %140 = vmatprep.subr.mxu0 0.0
    %141 = vmatpush1.msra.mxu0 %v73
    %142 = vmatprep.subr.mxu0 0.0
    %143 = vmatpush1.msra.mxu0 %v74
    %144 = vmatprep.subr.mxu0 0.0
    %145 = vmatpush1.msra.mxu0 %v75
    %146 = vmatprep.subr.mxu0 0.0
    %147 = vmatpush1.msra.mxu0 %v76
    %148 = vmatprep.mubr.f32.mxu0 %v44
    %149 = vmatmul.mubr.f32.gmra.mrb[0].mxu0 %v43
    %v150 = vpop.f32.mrb[0].mxu0
    %v151 = vadd.f32 %v82, %v150
    %v152 = vpop.f32.mrb[0].mxu0
    %153 = vdwg.mxu0
    %154 = vst [vmem:[#allocation9] sm:$0xff] %v151
    // Predicated region
    $region22: #{tpu_custom_call.1} parent=1 // pred_check
      _
    $region23: #{tpu_custom_call.1} parent=1 // pred_check_branch
      %156 = sbr.rel (0) target = $region25
    $region24: #{tpu_custom_call.1} parent=1 // pred_region
      %s158 = ssub.s32 128, 128
      %159 = vsyncadd [#allocation6], %s158
      %s161 = sshll.u32 [#allocation9], 4
      %s162 = int_to_ptr.vmem [resolvable:$true] %s161
      %164 = dma.vmem_to_hbm [thread:$0]  %s162, 128, %s4, [#allocation6]
    $region25: #{tpu_custom_call.1} parent=1 // pred_fallthru
      _
    // Predicated region
    $region26: #{tpu_custom_call.1} parent=1 // pred_check
      _
    $region27: #{tpu_custom_call.1} parent=1 // pred_check_branch
      %166 = sbr.rel (0) target = $region29
    $region28: #{tpu_custom_call.1} parent=1 // pred_region
      %167 = dma.done [#allocation6], 128
    $region29: #{tpu_custom_call.1} parent=1 // pred_fallthru
      _
    %168 = vsyncpa [#allocation5], 1
    %169 = vsyncpa [#allocation8], 1
    %170 = vsyncpa [#allocation6], 1

</llo_original>
